<compile_context>
chip_gen: v7x
topology: tpu7x:2x2x1
jax: 0.10.0
libtpu: 0.0.40
codegen_flags: <defaults>
</compile_context>

<pallas_src>
import jax
import jax.numpy as jnp
from jax.experimental import pallas as pl
from jax.experimental.pallas import tpu as pltpu


def mlp_kernel(x_ref, w1_ref, b1_ref, w2_ref, b2_ref, w3d_ref, b3d_ref, o_ref):
    # l1 + ReLU (bf16 matmul inputs, f32 accumulate / epilogue)
    h1 = jnp.dot(x_ref[...], w1_ref[...], preferred_element_type=jnp.float32)
    h1 = jnp.maximum(h1 + b1_ref[...], 0.0)
    # l2 + ReLU
    h2 = jnp.dot(h1.astype(jnp.bfloat16), w2_ref[...],
                 preferred_element_type=jnp.float32)
    h2 = jnp.maximum(h2 + b2_ref[...], 0.0)
    # l3 folded to the logit difference (l1 - l0): (TB, 1)
    d = jnp.dot(h2.astype(jnp.bfloat16), w3d_ref[...],
                preferred_element_type=jnp.float32) + b3d_ref[...]
    # 2-class softmax == [1 - sigmoid(d), sigmoid(d)]; exp -> EUP, recip -> EUP.
    p1 = pl.reciprocal(1.0 + jnp.exp(-d), approx=True)           # (TB, 1)
    col = jax.lax.broadcasted_iota(jnp.int32, o_ref.shape, 1)    # (TB, 2)
    o_ref[...] = jnp.where(col == 0, 1.0 - p1, p1)


def attack_nn_forward(x, w1, b1, w2, b2, w3, b3, *, tb=256):
    B, D = x.shape
    H1, H2, O = 128, 64, 2

    # bf16 MXU inputs (HBM-traffic / MXU-rate win); biases stay f32.
    xb = x.astype(jnp.bfloat16)
    w1b = w1.astype(jnp.bfloat16)
    w2b = w2.astype(jnp.bfloat16)
    # Fold the third layer into a single logit-difference column.
    w3d = (w3[:, 1] - w3[:, 0]).reshape(H2, 1).astype(jnp.bfloat16)
    b3d = (b3[1] - b3[0]).reshape(1, 1).astype(jnp.float32)
    b1r = b1.reshape(1, H1).astype(jnp.float32)
    b2r = b2.reshape(1, H2).astype(jnp.float32)

    # Batch tile: multiple of 256 rows for v6e/v7x MXU occupancy, clamped to B
    # for small batches (block then equals the full dim, satisfying (8,128)).
    tb = min(tb, B)
    grid = (pl.cdiv(B, tb),)

    resident = lambda shape: pl.BlockSpec(shape, lambda i: (0, 0))

    cost = pl.CostEstimate(
        flops=int(2 * B * (D * H1 + H1 * H2 + H2)),
        transcendentals=int(B),
        bytes_accessed=int(B * D * 2 + (D * H1 + H1 * H2 + H2) * 2
                           + (H1 + H2 + 1) * 4 + B * O * 4),
    )

    return pl.pallas_call(
        mlp_kernel,
        out_shape=jax.ShapeDtypeStruct((B, O), jnp.float32),
        grid=grid,
        in_specs=[
            pl.BlockSpec((tb, D), lambda i: (i, 0)),   # x: tiled over batch
            resident((D, H1)), resident((1, H1)),      # w1, b1 (VMEM-resident)
            resident((H1, H2)), resident((1, H2)),     # w2, b2
            resident((H2, 1)), resident((1, 1)),       # w3 diff col, b3 diff
        ],
        out_specs=pl.BlockSpec((tb, O), lambda i: (i, 0)),
        compiler_params=pltpu.CompilerParams(
            dimension_semantics=("parallel",),          # v7x: shard batch over 2 TCs
            vmem_limit_bytes=48 * 1024 * 1024,          # explicit, < v7x 64 MiB VMEM
        ),
        cost_estimate=cost,
    )(xb, w1b, b1r, w2b, b2r, w3d, b3d)


def init_params(key, input_dim):
    # Deterministic init mimicking nn.Linear's U(-1/sqrt(fan_in), 1/sqrt(fan_in)).
    dims = [(input_dim, 128), (128, 64), (64, 2)]
    params = []
    for (fan_in, fan_out) in dims:
        key, kw, kb = jax.random.split(key, 3)
        bound = 1.0 / jnp.sqrt(float(fan_in))
        w = jax.random.uniform(kw, (fan_in, fan_out), jnp.float32, -bound, bound)
        b = jax.random.uniform(kb, (fan_out,), jnp.float32, -bound, bound)
        params += [w, b]
    return params


if __name__ == "__main__":
    # input_dim is set externally in the original script; use a small value here.
    INPUT_DIM = 32
    BATCH = 8

    key = jax.random.PRNGKey(0)
    key, kx = jax.random.split(key)
    x = jax.random.normal(kx, (BATCH, INPUT_DIM), jnp.float32)
    w1, b1, w2, b2, w3, b3 = init_params(key, INPUT_DIM)

    out = attack_nn_forward(x, w1, b1, w2, b2, w3, b3)
    out = jax.block_until_ready(out)

    # sanity: softmax rows sum to 1
    assert out.shape == (BATCH, 2)
    assert jnp.allclose(jnp.sum(out, axis=-1), 1.0, atol=1e-5)

    # cross-check against a plain-JAX reference using the same bf16-cast
    # matmul inputs (math in f32); tolerance loosened for bf16 rounding.
    f32 = lambda a: a.astype(jnp.bfloat16).astype(jnp.float32)
    h1 = jnp.maximum(f32(x) @ f32(w1) + b1, 0.0)
    h2 = jnp.maximum(h1 @ f32(w2) + b2, 0.0)
    ref = jax.nn.softmax(h2 @ f32(w3) + b3, axis=-1)
    assert jnp.allclose(out, ref, atol=2e-2), float(jnp.max(jnp.abs(out - ref)))

    print("KERNEL_OK")
</pallas_src>

<mosaic_0001>
module attributes {stable_mosaic.version = 11 : i64} {
  func.func @mlp_kernel(%arg0: i32, %arg1: memref<8x32xbf16, #tpu.memory_space<vmem>>, %arg2: memref<32x128xbf16, #tpu.memory_space<vmem>>, %arg3: memref<1x128xf32, #tpu.memory_space<vmem>>, %arg4: memref<128x64xbf16, #tpu.memory_space<vmem>>, %arg5: memref<1x64xf32, #tpu.memory_space<vmem>>, %arg6: memref<64x1xbf16, #tpu.memory_space<vmem>>, %arg7: memref<1x1xf32, #tpu.memory_space<vmem>>, %arg8: memref<8x2xf32, #tpu.memory_space<vmem>>) attributes {dimension_semantics = [#tpu.dimension_semantics<parallel>], iteration_bounds = array<i64: 1>, scalar_prefetch = 0 : i64, scratch_operands = 0 : i64, tpu.core_type = #tpu.core_type<tc>, window_params = [{transform_indices = @transform_0, window_bounds = array<i64: 8, 32>}, {pipeline_mode = #tpu.pipeline_mode<synchronous>, transform_indices = @transform_1, window_bounds = array<i64: 32, 128>}, {pipeline_mode = #tpu.pipeline_mode<synchronous>, transform_indices = @transform_2, window_bounds = array<i64: 1, 128>}, {pipeline_mode = #tpu.pipeline_mode<synchronous>, transform_indices = @transform_3, window_bounds = array<i64: 128, 64>}, {pipeline_mode = #tpu.pipeline_mode<synchronous>, transform_indices = @transform_4, window_bounds = array<i64: 1, 64>}, {pipeline_mode = #tpu.pipeline_mode<synchronous>, transform_indices = @transform_5, window_bounds = array<i64: 64, 1>}, {pipeline_mode = #tpu.pipeline_mode<synchronous>, transform_indices = @transform_6, window_bounds = array<i64: 1, 1>}, {transform_indices = @transform_7, window_bounds = array<i64: 8, 2>}]} {
    %c0 = arith.constant 0 : index
    %c0_0 = arith.constant 0 : index
    %0 = vector.load %arg1[%c0, %c0_0] : memref<8x32xbf16, #tpu.memory_space<vmem>>, vector<8x32xbf16>
    %c0_1 = arith.constant 0 : index
    %c0_2 = arith.constant 0 : index
    %1 = vector.load %arg2[%c0_1, %c0_2] : memref<32x128xbf16, #tpu.memory_space<vmem>>, vector<32x128xbf16>
    %cst = arith.constant dense<0.000000e+00> : vector<8x128xf32>
    %2 = tpu.matmul %0, %1, %cst {dimension_numbers = #tpu.dot_dimension_numbers<[1], [0], [0], [1], [0, 0, 1, 1], [], []>} : vector<8x32xbf16>, vector<32x128xbf16>, vector<8x128xf32> -> vector<8x128xf32>
    %c0_3 = arith.constant 0 : index
    %c0_4 = arith.constant 0 : index
    %3 = vector.load %arg3[%c0_3, %c0_4] : memref<1x128xf32, #tpu.memory_space<vmem>>, vector<1x128xf32>
    %4 = vector.broadcast %3 : vector<1x128xf32> to vector<8x128xf32>
    %5 = arith.addf %2, %4 : vector<8x128xf32>
    %cst_5 = arith.constant 0.000000e+00 : f32
    %6 = vector.broadcast %cst_5 : f32 to vector<8x128xf32>
    %7 = arith.maximumf %5, %6 : vector<8x128xf32>
    %8 = arith.truncf %7 : vector<8x128xf32> to vector<8x128xbf16>
    %c0_6 = arith.constant 0 : index
    %c0_7 = arith.constant 0 : index
    %9 = vector.load %arg4[%c0_6, %c0_7] : memref<128x64xbf16, #tpu.memory_space<vmem>>, vector<128x64xbf16>
    %cst_8 = arith.constant dense<0.000000e+00> : vector<8x64xf32>
    %10 = tpu.matmul %8, %9, %cst_8 {dimension_numbers = #tpu.dot_dimension_numbers<[1], [0], [0], [1], [0, 0, 1, 1], [], []>} : vector<8x128xbf16>, vector<128x64xbf16>, vector<8x64xf32> -> vector<8x64xf32>
    %c0_9 = arith.constant 0 : index
    %c0_10 = arith.constant 0 : index
    %11 = vector.load %arg5[%c0_9, %c0_10] : memref<1x64xf32, #tpu.memory_space<vmem>>, vector<1x64xf32>
    %12 = vector.broadcast %11 : vector<1x64xf32> to vector<8x64xf32>
    %13 = arith.addf %10, %12 : vector<8x64xf32>
    %cst_11 = arith.constant 0.000000e+00 : f32
    %14 = vector.broadcast %cst_11 : f32 to vector<8x64xf32>
    %15 = arith.maximumf %13, %14 : vector<8x64xf32>
    %16 = arith.truncf %15 : vector<8x64xf32> to vector<8x64xbf16>
    %c0_12 = arith.constant 0 : index
    %c0_13 = arith.constant 0 : index
    %17 = vector.load %arg6[%c0_12, %c0_13] : memref<64x1xbf16, #tpu.memory_space<vmem>>, vector<64x1xbf16>
    %cst_14 = arith.constant dense<0.000000e+00> : vector<8x1xf32>
    %18 = tpu.matmul %16, %17, %cst_14 {dimension_numbers = #tpu.dot_dimension_numbers<[1], [0], [0], [1], [0, 0, 1, 1], [], []>} : vector<8x64xbf16>, vector<64x1xbf16>, vector<8x1xf32> -> vector<8x1xf32>
    %c0_15 = arith.constant 0 : index
    %c0_16 = arith.constant 0 : index
    %19 = vector.load %arg7[%c0_15, %c0_16] : memref<1x1xf32, #tpu.memory_space<vmem>>, vector<1x1xf32>
    %20 = vector.broadcast %19 : vector<1x1xf32> to vector<8x1xf32>
    %21 = arith.addf %18, %20 : vector<8x1xf32>
    %cst_17 = arith.constant 0.000000e+00 : f32
    %22 = vector.broadcast %cst_17 : f32 to vector<8x1xf32>
    %23 = arith.subf %22, %21 : vector<8x1xf32>
    %24 = math.exp %23 : vector<8x1xf32>
    %cst_18 = arith.constant 1.000000e+00 : f32
    %25 = vector.broadcast %cst_18 : f32 to vector<8x1xf32>
    %26 = arith.addf %25, %24 : vector<8x1xf32>
    %27 = tpu.reciprocal %26 {approx = true} : vector<8x1xf32> -> vector<8x1xf32>
    %28 = tpu.iota {dimensions = array<i32: 1>} : vector<8x2xi32>
    %c0_i32 = arith.constant 0 : i32
    %29 = vector.broadcast %c0_i32 : i32 to vector<8x2xi32>
    %30 = arith.cmpi eq, %28, %29 : vector<8x2xi32>
    %cst_19 = arith.constant 1.000000e+00 : f32
    %31 = vector.broadcast %cst_19 : f32 to vector<8x1xf32>
    %32 = arith.subf %31, %27 : vector<8x1xf32>
    %33 = vector.shape_cast %32 : vector<8x1xf32> to vector<8x1xf32>
    %34 = vector.broadcast %33 : vector<8x1xf32> to vector<8x2xf32>
    %35 = vector.shape_cast %27 : vector<8x1xf32> to vector<8x1xf32>
    %36 = vector.broadcast %35 : vector<8x1xf32> to vector<8x2xf32>
    %37 = arith.select %30, %34, %36 : vector<8x2xi1>, vector<8x2xf32>
    %c0_20 = arith.constant 0 : index
    %c0_21 = arith.constant 0 : index
    %38 = vector.load %arg8[%c0_20, %c0_21] : memref<8x2xf32, #tpu.memory_space<vmem>>, vector<8x2xf32>
    tpu.vector_store %arg8[%c0_20, %c0_21], %37 {strides = array<i32>} : memref<8x2xf32, #tpu.memory_space<vmem>>, vector<8x2xf32>,
    return
  }
  func.func @transform_0(%arg0: i32) -> (i32, i32) {
    %c0_i32 = arith.constant 0 : i32
    %c0_i32_0 = arith.constant 0 : i32
    return %arg0, %c0_i32 : i32, i32
  }
  func.func @transform_1(%arg0: i32) -> (i32, i32) {
    %c0_i32 = arith.constant 0 : i32
    %c0_i32_0 = arith.constant 0 : i32
    %c0_i32_1 = arith.constant 0 : i32
    return %c0_i32, %c0_i32_0 : i32, i32
  }
  func.func @transform_2(%arg0: i32) -> (i32, i32) {
    %c0_i32 = arith.constant 0 : i32
    %c0_i32_0 = arith.constant 0 : i32
    %c0_i32_1 = arith.constant 0 : i32
    return %c0_i32, %c0_i32_0 : i32, i32
  }
  func.func @transform_3(%arg0: i32) -> (i32, i32) {
    %c0_i32 = arith.constant 0 : i32
    %c0_i32_0 = arith.constant 0 : i32
    %c0_i32_1 = arith.constant 0 : i32
    return %c0_i32, %c0_i32_0 : i32, i32
  }
  func.func @transform_4(%arg0: i32) -> (i32, i32) {
    %c0_i32 = arith.constant 0 : i32
    %c0_i32_0 = arith.constant 0 : i32
    %c0_i32_1 = arith.constant 0 : i32
    return %c0_i32, %c0_i32_0 : i32, i32
  }
  func.func @transform_5(%arg0: i32) -> (i32, i32) {
    %c0_i32 = arith.constant 0 : i32
    %c0_i32_0 = arith.constant 0 : i32
    %c0_i32_1 = arith.constant 0 : i32
    return %c0_i32, %c0_i32_0 : i32, i32
  }
  func.func @transform_6(%arg0: i32) -> (i32, i32) {
    %c0_i32 = arith.constant 0 : i32
    %c0_i32_0 = arith.constant 0 : i32
    %c0_i32_1 = arith.constant 0 : i32
    return %c0_i32, %c0_i32_0 : i32, i32
  }
  func.func @transform_7(%arg0: i32) -> (i32, i32) {
    %c0_i32 = arith.constant 0 : i32
    %c0_i32_0 = arith.constant 0 : i32
    return %arg0, %c0_i32 : i32, i32
  }
}

</mosaic_0001>

<llo_original>
// kernel: tpu_custom_call.1
$region0: #{tpu_custom_call.1}
  #allocation0 [shape = 'u32[]', space=smem, size = 0x4, offset = 0x4, fixed_abs, tag = 'smem constant byte address 0x4 - core index']
  #allocation1 [shape = 'u32[144,128]{1,0:T(1,128)}', space=vmem, size = 0x12000, scoped, tag = 'internal scratch']
  #allocation2 [shape = 'f32[1,1]{1,0:T(1,128)S(1)}', space=vmem, size = 0x200, scoped, tag = 'scoped memory for tpu_custom_call.1']
  %s0 = inlined_call_operand.vmem [shape: bf16[8,32], index: 0, kind: input, shape index: {}]
  %s1 = inlined_call_operand.vmem [shape: bf16[32,128], index: 1, kind: input, shape index: {}]
  %s2 = inlined_call_operand.vmem [shape: f32[1,128], index: 2, kind: input, shape index: {}]
  %s3 = inlined_call_operand.vmem [shape: bf16[128,64], index: 3, kind: input, shape index: {}]
  %s4 = inlined_call_operand.vmem [shape: f32[1,64], index: 4, kind: input, shape index: {}]
  %s5 = inlined_call_operand.vmem [shape: bf16[64,1], index: 5, kind: input, shape index: {}]
  %s6 = inlined_call_operand.<no memory space> [shape: f32[1,1], index: 6, kind: input, shape index: {}]
  %s7 = inlined_call_operand.vmem [shape: f32[8,2], index: 7, kind: output, shape index: {}]
  %s8 = sld [smem:[#allocation0]]
  $region38: #{tpu_custom_call.1} parent=0
    _
  %s10 = ssub.s32 1, %s8
  %s11 = scalar_select 0, %s10, %s8
  %v12 = vstv %s6
  %13 = vst [vmem:[#allocation2] sm:$0x1] %v12
  // Predicated region
  $region2: #{tpu_custom_call.1} parent=0 // pred_check
    _
  $region3: #{tpu_custom_call.1} parent=0 // pred_check_branch
    %15 = sbr.rel (0) target = $region5
  $region4: #{tpu_custom_call.1} parent=0 // pred_region
    _
  $region5: #{tpu_custom_call.1} parent=0 // pred_fallthru
    _
  // Predicated region
  $region6: #{tpu_custom_call.1} parent=0 // pred_check
    _
  $region7: #{tpu_custom_call.1} parent=0 // pred_check_branch
    %17 = sbr.rel (0) target = $region9
  $region8: #{tpu_custom_call.1} parent=0 // pred_region
    _
  $region9: #{tpu_custom_call.1} parent=0 // pred_fallthru
    _
  // Predicated region
  $region10: #{tpu_custom_call.1} parent=0 // pred_check
    _
  $region11: #{tpu_custom_call.1} parent=0 // pred_check_branch
    %19 = sbr.rel (0) target = $region13
  $region12: #{tpu_custom_call.1} parent=0 // pred_region
    _
  $region13: #{tpu_custom_call.1} parent=0 // pred_fallthru
    _
  // Predicated region
  $region14: #{tpu_custom_call.1} parent=0 // pred_check
    _
  $region15: #{tpu_custom_call.1} parent=0 // pred_check_branch
    %21 = sbr.rel (0) target = $region17
  $region16: #{tpu_custom_call.1} parent=0 // pred_region
    _
  $region17: #{tpu_custom_call.1} parent=0 // pred_fallthru
    _
  // Predicated region
  $region18: #{tpu_custom_call.1} parent=0 // pred_check
    _
  $region19: #{tpu_custom_call.1} parent=0 // pred_check_branch
    %23 = sbr.rel (0) target = $region21
  $region20: #{tpu_custom_call.1} parent=0 // pred_region
    _
  $region21: #{tpu_custom_call.1} parent=0 // pred_fallthru
    _
  // Predicated region
  $region22: #{tpu_custom_call.1} parent=0 // pred_check
    _
  $region23: #{tpu_custom_call.1} parent=0 // pred_check_branch
    %25 = sbr.rel (0) target = $region25
  $region24: #{tpu_custom_call.1} parent=0 // pred_region
    _
  $region25: #{tpu_custom_call.1} parent=0 // pred_fallthru
    _
  // Predicated region
  $region26: #{tpu_custom_call.1} parent=0 // pred_check
    _
  $region27: #{tpu_custom_call.1} parent=0 // pred_check_branch
    %27 = sbr.rel (0) target = $region29
  $region28: #{tpu_custom_call.1} parent=0 // pred_region
    _
  $region29: #{tpu_custom_call.1} parent=0 // pred_fallthru
    _
  %v29 = vld [vmem:[%s0] sm:$0xf]
  %v30 = vld [vmem:[%s1] sm:$0xf]
  %v31 = vld [vmem:[%s1 + $0x4] sm:$0xf]
  %v32 = vld [vmem:[%s1 + $0x8] sm:$0xf]
  %v33 = vld [vmem:[%s1 + $0xc] sm:$0xf]
  %v34 = vld [vmem:[%s2] sm:$0x1]
  %v36 = vlaneseq
  %v37 = vshrl.u32 %v36, 7
  %v38 = vsub.s32 0, %v37
  %v39 = vrot.slane %v34, %v38
  %v45 = vunpack.c.l.b16 %v30
  %v46 = vunpack.c.l.b16 %v31
  %v47 = vunpack.c.l.b16 %v32
  %v48 = vunpack.c.l.b16 %v33
  %v49 = vpack.c.b16 %v46, %v45
  %v50 = vpack.c.b16 %v48, %v47
  %vm53 = vcmask 261120
  %v55 = vsel %vm53, %v29, 0
  %57 = vmatprep.subr.bf16.mxu0 0
  %58 = vmatpush1.bf16.msra.mxu0 %v49
  %59 = vmatprep.subr.bf16.mxu0 0
  %60 = vmatpush1.bf16.msra.mxu0 %v50
  %61 = vmatprep.subr.bf16.mxu0 0
  %62 = vmatpush1.bf16.msra.mxu0 0
  %63 = vmatprep.subr.bf16.mxu0 0
  %64 = vmatpush1.bf16.msra.mxu0 0
  %65 = vmatprep.subr.bf16.mxu0 0
  %66 = vmatpush1.bf16.msra.mxu0 0
  %67 = vmatprep.subr.bf16.mxu0 0
  %68 = vmatpush1.bf16.msra.mxu0 0
  %69 = vmatprep.subr.bf16.mxu0 0
  %70 = vmatpush1.bf16.msra.mxu0 0
  %71 = vmatprep.subr.bf16.mxu0 0
  %72 = vmatpush1.bf16.msra.mxu0 0
  %73 = vmatprep.subr.bf16.mxu0 0
  %74 = vmatpush1.bf16.msra.mxu0 0
  %75 = vmatprep.subr.bf16.mxu0 0
  %76 = vmatpush1.bf16.msra.mxu0 0
  %77 = vmatprep.subr.bf16.mxu0 0
  %78 = vmatpush1.bf16.msra.mxu0 0
  %79 = vmatprep.subr.bf16.mxu0 0
  %80 = vmatpush1.bf16.msra.mxu0 0
  %81 = vmatprep.subr.bf16.mxu0 0
  %82 = vmatpush1.bf16.msra.mxu0 0
  %83 = vmatprep.subr.bf16.mxu0 0
  %84 = vmatpush1.bf16.msra.mxu0 0
  %85 = vmatprep.subr.bf16.mxu0 0
  %86 = vmatpush1.bf16.msra.mxu0 0
  %87 = vmatprep.subr.bf16.mxu0 0
  %88 = vmatpush1.bf16.msra.mxu0 0
  %89 = vmatprep.mubr.bf16.mxu0 0
  %90 = vmatmul.mubr.bf16.gmra.mrb[0].mxu0 %v55
  %v91 = vpop.f32.mrb[0].mxu0
  %v92 = vadd.f32 %v39, %v91
  %v93 = vpop.f32.mrb[0].mxu0
  %v94 = vpop.f32.mrb[0].mxu0
  %v95 = vpop.f32.mrb[0].mxu0
  %96 = vdwg.mxu0
  %v97 = vmax.f32 %v92, 0.0
  %v98 = vpack.c.bf16 %v97, %v97
  %v99 = vld [vmem:[%s3] sm:$0xf]
  %v100 = vld [vmem:[%s3 + $0x4] sm:$0xf]
  %v101 = vld [vmem:[%s3 + $0x8] sm:$0xf]
  %v102 = vld [vmem:[%s3 + $0xc] sm:$0xf]
  %v103 = vld [vmem:[%s3 + $0x10] sm:$0xf]
  %v104 = vld [vmem:[%s3 + $0x14] sm:$0xf]
  %v105 = vld [vmem:[%s3 + $0x18] sm:$0xf]
  %v106 = vld [vmem:[%s3 + $0x1c] sm:$0xf]
  %v107 = vld [vmem:[%s3 + $0x20] sm:$0xf]
  %v108 = vld [vmem:[%s3 + $0x24] sm:$0xf]
  %v109 = vld [vmem:[%s3 + $0x28] sm:$0xf]
  %v110 = vld [vmem:[%s3 + $0x2c] sm:$0xf]
  %v111 = vld [vmem:[%s3 + $0x30] sm:$0xf]
  %v112 = vld [vmem:[%s3 + $0x34] sm:$0xf]
  %v113 = vld [vmem:[%s3 + $0x38] sm:$0xf]
  %v114 = vld [vmem:[%s3 + $0x3c] sm:$0xf]
  %v115 = vld [vmem:[%s4] sm:$0x1]
  %v117 = vlaneseq
  %v118 = vshrl.u32 %v117, 7
  %v119 = vsub.s32 0, %v118
  %v120 = vrot.slane %v115, %v119
  %v138 = vunpack.c.l.b16 %v99
  %v139 = vunpack.c.l.b16 %v100
  %v140 = vunpack.c.l.b16 %v101
  %v141 = vunpack.c.l.b16 %v102
  %v142 = vunpack.c.l.b16 %v103
  %v143 = vunpack.c.l.b16 %v104
  %v144 = vunpack.c.l.b16 %v105
  %v145 = vunpack.c.l.b16 %v106
  %v146 = vunpack.c.l.b16 %v107
  %v147 = vunpack.c.l.b16 %v108
  %v148 = vunpack.c.l.b16 %v109
  %v149 = vunpack.c.l.b16 %v110
  %v150 = vunpack.c.l.b16 %v111
  %v151 = vunpack.c.l.b16 %v112
  %v152 = vunpack.c.l.b16 %v113
  %v153 = vunpack.c.l.b16 %v114
  %v154 = vpack.c.b16 %v139, %v138
  %v155 = vpack.c.b16 %v141, %v140
  %v156 = vpack.c.b16 %v143, %v142
  %v157 = vpack.c.b16 %v145, %v144
  %v158 = vpack.c.b16 %v147, %v146
  %v159 = vpack.c.b16 %v149, %v148
  %v160 = vpack.c.b16 %v151, %v150
  %v161 = vpack.c.b16 %v153, %v152
  %170 = vmatprep.subr.bf16.mxu0 0
  %171 = vmatpush1.bf16.msra.mxu0 %v154
  %172 = vmatprep.subr.bf16.mxu0 0
  %173 = vmatpush1.bf16.msra.mxu0 %v155
  %174 = vmatprep.subr.bf16.mxu0 0
  %175 = vmatpush1.bf16.msra.mxu0 %v156
  %176 = vmatprep.subr.bf16.mxu0 0
  %177 = vmatpush1.bf16.msra.mxu0 %v157
  %178 = vmatprep.subr.bf16.mxu0 0
  %179 = vmatpush1.bf16.msra.mxu0 %v158
  %180 = vmatprep.subr.bf16.mxu0 0
  %181 = vmatpush1.bf16.msra.mxu0 %v159
  %182 = vmatprep.subr.bf16.mxu0 0
  %183 = vmatpush1.bf16.msra.mxu0 %v160
  %184 = vmatprep.subr.bf16.mxu0 0
  %185 = vmatpush1.bf16.msra.mxu0 %v161
  %186 = vmatprep.subr.bf16.mxu0 0
  %187 = vmatpush1.bf16.msra.mxu0 0
  %188 = vmatprep.subr.bf16.mxu0 0
  %189 = vmatpush1.bf16.msra.mxu0 0
  %190 = vmatprep.subr.bf16.mxu0 0
  %191 = vmatpush1.bf16.msra.mxu0 0
  %192 = vmatprep.subr.bf16.mxu0 0
  %193 = vmatpush1.bf16.msra.mxu0 0
  %194 = vmatprep.subr.bf16.mxu0 0
  %195 = vmatpush1.bf16.msra.mxu0 0
  %196 = vmatprep.subr.bf16.mxu0 0
  %197 = vmatpush1.bf16.msra.mxu0 0
  %198 = vmatprep.subr.bf16.mxu0 0
  %199 = vmatpush1.bf16.msra.mxu0 0
  %200 = vmatprep.subr.bf16.mxu0 0
  %201 = vmatpush1.bf16.msra.mxu0 0
  %202 = vmatprep.mubr.bf16.mxu0 0
  %203 = vmatmul.mubr.bf16.gmra.mrb[0].mxu0 %v98
  %v204 = vpop.f32.mrb[0].mxu0
  %v205 = vadd.f32 %v120, %v204
  %v206 = vpop.f32.mrb[0].mxu0
  %v207 = vpop.f32.mrb[0].mxu0
  %v208 = vpop.f32.mrb[0].mxu0
  %209 = vdwg.mxu0
  %v210 = vmax.f32 %v205, 0.0
  %v211 = vpack.c.bf16 %v210, %v210
  %v212 = vld [vmem:[%s5] sm:$0xf]
  %v213 = vld [vmem:[%s5 + $0x4] sm:$0xf]
  %v214 = vld [vmem:[%s5 + $0x8] sm:$0xf]
  %v215 = vld [vmem:[%s5 + $0xc] sm:$0xf]
  %v216 = vld [vmem:[%s5 + $0x10] sm:$0xf]
  %v217 = vld [vmem:[%s5 + $0x14] sm:$0xf]
  %v218 = vld [vmem:[%s5 + $0x18] sm:$0xf]
  %v219 = vld [vmem:[%s5 + $0x1c] sm:$0xf]
  %v220 = vld [vmem:[#allocation2] sm:$0x1]
  %v222 = vlaneseq
  %v223 = vshrl.u32 %v222, 7
  %v224 = vsub.s32 0, %v223
  %v225 = vrot.slane %v220, %v224
  %v235 = vunpack.c.l.b16 %v212
  %v236 = vunpack.c.l.b16 %v213
  %v237 = vunpack.c.l.b16 %v214
  %v238 = vunpack.c.l.b16 %v215
  %v239 = vunpack.c.l.b16 %v216
  %v240 = vunpack.c.l.b16 %v217
  %v241 = vunpack.c.l.b16 %v218
  %v242 = vunpack.c.l.b16 %v219
  %v243 = vpack.c.b16 %v236, %v235
  %v244 = vpack.c.b16 %v238, %v237
  %v245 = vpack.c.b16 %v240, %v239
  %v246 = vpack.c.b16 %v242, %v241
  %vm251 = vcmask 523264
  %v253 = vsel %vm251, %v211, 0
  %255 = vmatprep.subr.bf16.mxu0 0
  %256 = vmatpush1.bf16.msra.mxu0 %v243
  %257 = vmatprep.subr.bf16.mxu0 0
  %258 = vmatpush1.bf16.msra.mxu0 %v244
  %259 = vmatprep.subr.bf16.mxu0 0
  %260 = vmatpush1.bf16.msra.mxu0 %v245
  %261 = vmatprep.subr.bf16.mxu0 0
  %262 = vmatpush1.bf16.msra.mxu0 %v246
  %263 = vmatprep.subr.bf16.mxu0 0
  %264 = vmatpush1.bf16.msra.mxu0 0
  %265 = vmatprep.subr.bf16.mxu0 0
  %266 = vmatpush1.bf16.msra.mxu0 0
  %267 = vmatprep.subr.bf16.mxu0 0
  %268 = vmatpush1.bf16.msra.mxu0 0
  %269 = vmatprep.subr.bf16.mxu0 0
  %270 = vmatpush1.bf16.msra.mxu0 0
  %271 = vmatprep.subr.bf16.mxu0 0
  %272 = vmatpush1.bf16.msra.mxu0 0
  %273 = vmatprep.subr.bf16.mxu0 0
  %274 = vmatpush1.bf16.msra.mxu0 0
  %275 = vmatprep.subr.bf16.mxu0 0
  %276 = vmatpush1.bf16.msra.mxu0 0
  %277 = vmatprep.subr.bf16.mxu0 0
  %278 = vmatpush1.bf16.msra.mxu0 0
  %279 = vmatprep.subr.bf16.mxu0 0
  %280 = vmatpush1.bf16.msra.mxu0 0
  %281 = vmatprep.subr.bf16.mxu0 0
  %282 = vmatpush1.bf16.msra.mxu0 0
  %283 = vmatprep.subr.bf16.mxu0 0
  %284 = vmatpush1.bf16.msra.mxu0 0
  %285 = vmatprep.subr.bf16.mxu0 0
  %286 = vmatpush1.bf16.msra.mxu0 0
  %287 = vmatprep.mubr.bf16.mxu0 0
  %288 = vmatmul.mubr.bf16.gmra.mrb[0].mxu0 %v253
  %v289 = vpop.f32.mrb[0].mxu0
  %v290 = vadd.f32 %v225, %v289
  %v291 = vpop.f32.mrb[0].mxu0
  %v292 = vpop.f32.mrb[0].mxu0
  %v293 = vpop.f32.mrb[0].mxu0
  %294 = vdwg.mxu0
  %v295 = vsub.f32 0.0, %v290
  %v296 = vmul.f32 %v295, 1.442695
  %v297 = vpow.pop %v296
  %v298 = vadd.f32 %v297, 1.0
  %v299 = vrcp.pop %v298
  %v300 = vlaneseq
  %v301 = vand.u32 %v300, 127
  %vm302 = vcmp.eq.s32.totalorder %v301, 0
  %v303 = vsub.f32 1.0, %v299
  %305 = vset.pattern.permute.xlu0 0
  %306 = vperm.xlu0 %305, %v303
  %v307 = vpop.permute.xlu0 %306
  %310 = vset.pattern.permute.xlu0 0
  %311 = vperm.xlu0 %310, %v299
  %v312 = vpop.permute.xlu0 %311
  %v314 = vsel %vm302, %v307, %v312
  %vm315 = vcmask 15360
  %316 = vst.msk [vmem:[%s7] sm:$0xff] %vm315, %v314
  // Predicated region
  $region30: #{tpu_custom_call.1} parent=0 // pred_check
    _
  $region31: #{tpu_custom_call.1} parent=0 // pred_check_branch
    %318 = sbr.rel (0) target = $region33
  $region32: #{tpu_custom_call.1} parent=0 // pred_region
    _
  $region33: #{tpu_custom_call.1} parent=0 // pred_fallthru
    _
  // Predicated region
  $region34: #{tpu_custom_call.1} parent=0 // pred_check
    _
  $region35: #{tpu_custom_call.1} parent=0 // pred_check_branch
    %320 = sbr.rel (0) target = $region37
  $region36: #{tpu_custom_call.1} parent=0 // pred_region
    _
  $region37: #{tpu_custom_call.1} parent=0 // pred_fallthru
    _

</llo_original>
